<compile_context>
chip_gen: v5e
topology: v5e:2x2
jax: 0.10.0
libtpu: 0.0.40
codegen_flags: <defaults>
</compile_context>

<pallas_src>
import jax
import jax.numpy as jnp
from jax.experimental import pallas as pl
from jax.experimental.pallas import tpu as pltpu

_LANE = 128


# ---------------------------------------------------------------------------
# Kernels
# ---------------------------------------------------------------------------
def _mxu_kernel(x_ref, w_ref, b_ref, o_ref):
    # x_ref: (Nb, C_in, T)   w_ref: (C_out, C_in)   b_ref: (C_out, 1) f32
    # o_ref: (Nb, C_out, T)
    nb = x_ref.shape[0]
    w = w_ref[...]
    b = b_ref[...]

    def one_image(n, carry):
        acc = jnp.dot(w, x_ref[n], preferred_element_type=jnp.float32)
        o_ref[n] = (acc + b).astype(o_ref.dtype)
        return carry

    if nb == 1:
        one_image(0, 0)
    else:
        jax.lax.fori_loop(0, nb, one_image, 0)


def _vpu_kernel(x_ref, w_ref, b_ref, o_ref):
    # Small-channel path: exact f32, full-vreg broadcast FMAs.
    # x_ref: (Nb, C_in, T)   w_ref: (C_out, C_in) f32   b_ref: (C_out, 1) f32
    # o_ref: (Nb, C_out, T)
    nb, c_in, _ = x_ref.shape
    w = w_ref[...]
    b = b_ref[...]

    def one_image(n, carry):
        # (C_out, 1) weight column  x  (1, T) input row  -> (C_out, T) FMA.
        acc = w[:, 0:1] * x_ref[n, pl.ds(0, 1), :].astype(jnp.float32)
        for i in range(1, c_in):  # static unroll over channels (small by design)
            acc = acc + w[:, i:i + 1] * x_ref[n, pl.ds(i, 1), :].astype(jnp.float32)
        o_ref[n] = (acc + b).astype(o_ref.dtype)
        return carry

    if nb == 1:
        one_image(0, 0)
    else:
        jax.lax.fori_loop(0, nb, one_image, 0)


# ---------------------------------------------------------------------------
# Tiling / VMEM budgeting
# ---------------------------------------------------------------------------
def _vmem_budget():
    """Returns (vmem_limit_bytes, tile_budget_bytes), generation-aware.

    v5e/v6e (128 MiB physical): limit 64 MiB, tile budget 48 MiB.
    v7x      (64 MiB physical): limit 32 MiB, tile budget 24 MiB.
    """
    try:
        phys = int(pltpu.get_tpu_info().vmem_capacity_bytes)
    except Exception:
        phys = 64 * 1024 * 1024  # conservative (v7x-sized) fallback
    limit = min(phys // 2, 64 * 1024 * 1024)
    return limit, (limit * 3) // 4


def _choose_tiling(n, s, c_in, c_out, itemsize, budget_bytes,
                   target_bytes=8 * 1024 * 1024, max_step_elems=None):
    """Pick (Nb, TILE).

    Per grid step we move Nb*TILE*(C_in+C_out)*itemsize bytes of HBM traffic;
    aim for ~target_bytes/step while keeping double-buffered in/out tiles plus
    f32 in-kernel temporaries under budget_bytes.
    """
    hbm_per_elem = (c_in + c_out) * itemsize
    # double-buffered input+output tiles + f32 accumulator / row temporaries
    vmem_per_elem = 2 * hbm_per_elem + 4 * (c_in + 2 * c_out)
    elems = min(max(_LANE, budget_bytes // vmem_per_elem),
                max(_LANE, target_bytes // hbm_per_elem))
    if max_step_elems is not None:
        elems = max(_LANE, min(elems, max_step_elems))

    if elems >= s:
        # Tile covers the whole spatial extent -> block over batch instead
        # (one contiguous DMA of Nb full images per step).
        return max(1, min(n, elems // s)), s
    # Spatial tiling; TILE must be a multiple of 128 when it is not the full
    # extent. The ragged last block is handled by masked OOB stores.
    return 1, max(_LANE, (elems // _LANE) * _LANE)


# ---------------------------------------------------------------------------
# Wrapper
# ---------------------------------------------------------------------------
def pointwise_conv_transpose_nd(x, weight, bias, *, force_mxu=False,
                                _max_step_elems=None):
    """Pointwise ConvTransposeNd (kernel_size=1, stride=1, padding=0, groups=1).

    x:      (N, C_in, *spatial)       any number of spatial dims (dim = 1/2/3)
    weight: (C_in, C_out, 1, ..., 1)  PyTorch ConvTransposeNd layout
    bias:   (C_out,)
    returns (N, C_out, *spatial), dtype of x.
    """
    N, C_in = int(x.shape[0]), int(x.shape[1])
    spatial = tuple(int(d) for d in x.shape[2:])
    C_out = int(weight.shape[1])
    S = 1
    for d in spatial:
        S *= d

    x3 = x.reshape(N, C_in, S)                  # free reshape, stays channels-first
    w_oc_ic = weight.reshape(C_in, C_out).T     # tiny (C_out, C_in)

    vmem_limit, tile_budget = _vmem_budget()
    Nb, tile = _choose_tiling(N, S, C_in, C_out, x.dtype.itemsize, tile_budget,
                              max_step_elems=_max_step_elems)

    grid = (pl.cdiv(N, Nb), pl.cdiv(S, tile))
    x_spec = pl.BlockSpec((Nb, C_in, tile), lambda n, s: (n, 0, s))
    o_spec = pl.BlockSpec((Nb, C_out, tile), lambda n, s: (n, 0, s))
    w_spec = pl.BlockSpec((C_out, C_in), lambda n, s: (0, 0))   # resident in VMEM
    b_spec = pl.BlockSpec((C_out, 1), lambda n, s: (0, 0))      # resident in VMEM

    use_mxu = force_mxu or C_in > 16 or C_out > 16
    if use_mxu:
        kernel = _mxu_kernel
        w_arg = w_oc_ic.astype(x.dtype)
    else:
        kernel = _vpu_kernel
        w_arg = w_oc_ic.astype(jnp.float32)
    b_arg = bias.astype(jnp.float32).reshape(C_out, 1)

    out = pl.pallas_call(
        kernel,
        out_shape=jax.ShapeDtypeStruct((N, C_out, S), x.dtype),
        grid_spec=pltpu.PrefetchScalarGridSpec(
            num_scalar_prefetch=0,
            grid=grid,
            in_specs=[x_spec, w_spec, b_spec],
            out_specs=o_spec,
        ),
        compiler_params=pltpu.CompilerParams(
            dimension_semantics=("parallel", "parallel"),
            vmem_limit_bytes=vmem_limit,
        ),
    )(x3, w_arg, b_arg)

    return out.reshape((N, C_out) + spatial)


def init_params(key, in_channels, out_channels, n_spatial_dims=2, dtype=jnp.float32):
    """Synthetic init mirroring the module's parameter shapes.

    weight: (C_in, C_out, 1, ..., 1), trunc_normal_(std=0.02) (timm default).
    bias:   (C_out,), ConvTranspose default uniform(-1/sqrt(fan_in), +).
    """
    kw, kb = jax.random.split(key)
    w_shape = (in_channels, out_channels) + (1,) * n_spatial_dims
    w = 0.02 * jax.random.truncated_normal(kw, -2.0, 2.0, w_shape, dtype)
    fan_in = in_channels  # kernel_size = 1
    bound = 1.0 / jnp.sqrt(float(fan_in))
    b = jax.random.uniform(kb, (out_channels,), dtype, -bound, bound)
    return w, b


if __name__ == "__main__":
    key = jax.random.PRNGKey(0)
    k_x, k_p, k_x1, k_x2 = jax.random.split(key, 4)

    # dim=2 case (matches the module with dim=2)
    N, C_in, H, W = 2, 4, 16, 16
    C_out = 8
    x = jax.random.normal(k_x, (N, C_in, H, W), jnp.float32)
    weight, bias = init_params(k_p, C_in, C_out, n_spatial_dims=2)
    w2d = weight.reshape(C_in, C_out)

    # Default (VPU, exact f32) path: full-spatial tile + batch blocking.
    y = jax.block_until_ready(pointwise_conv_transpose_nd(x, weight, bias))
    y_ref = jnp.einsum("nihw,io->nohw", x, w2d) + bias[None, :, None, None]
    assert y.shape == (N, C_out, H, W)
    assert jnp.allclose(y, y_ref, atol=1e-5, rtol=1e-5)

    # MXU path (automatically used for larger channel counts). f32 matmul on
    # the MXU is multi-pass bf16, so allow a slightly looser tolerance.
    y_mxu = jax.block_until_ready(
        pointwise_conv_transpose_nd(x, weight, bias, force_mxu=True))
    assert jnp.allclose(y_mxu, y_ref, atol=1e-3, rtol=1e-3)

    # dim=1 case with a spatial length that is not a multiple of 128
    # (lane-ragged full-extent tile, no wrapper pad/slice).
    L = 37
    x1 = jax.random.normal(k_x1, (N, C_in, L), jnp.float32)
    y1 = jax.block_until_ready(
        pointwise_conv_transpose_nd(x1, weight.reshape(C_in, C_out, 1), bias))
    y1_ref = jnp.einsum("nil,io->nol", x1, w2d) + bias[None, :, None]
    assert y1.shape == (N, C_out, L)
    assert jnp.allclose(y1, y1_ref, atol=1e-5, rtol=1e-5)

    # Force the spatially-tiled path (tile < S): ragged last spatial block is
    # handled by Pallas' masked out-of-bounds stores, no pad/slice in HBM.
    H2 = W2 = 20  # S = 400, tile capped to 256
    x2 = jax.random.normal(k_x2, (N, C_in, H2, W2), jnp.float32)
    y2 = jax.block_until_ready(
        pointwise_conv_transpose_nd(x2, weight, bias, _max_step_elems=256))
    y2_ref = jnp.einsum("nihw,io->nohw", x2, w2d) + bias[None, :, None, None]
    assert y2.shape == (N, C_out, H2, W2)
    assert jnp.allclose(y2, y2_ref, atol=1e-5, rtol=1e-5)

    print("KERNEL_OK")
</pallas_src>

<mosaic_0001>
module attributes {stable_mosaic.version = 11 : i64} {
  func.func @_vpu_kernel(%arg0: i32, %arg1: i32, %arg2: memref<2x4x256xf32, #tpu.memory_space<vmem>>, %arg3: memref<8x4xf32, #tpu.memory_space<vmem>>, %arg4: memref<8x1xf32, #tpu.memory_space<vmem>>, %arg5: memref<2x8x256xf32, #tpu.memory_space<vmem>>) attributes {dimension_semantics = [#tpu.dimension_semantics<parallel>, #tpu.dimension_semantics<parallel>], iteration_bounds = array<i64: 1, 1>, scalar_prefetch = 0 : i64, scratch_operands = 0 : i64, tpu.core_type = #tpu.core_type<tc>, window_params = [{transform_indices = @transform_0, window_bounds = array<i64: 2, 4, 256>}, {pipeline_mode = #tpu.pipeline_mode<synchronous>, transform_indices = @transform_1, window_bounds = array<i64: 8, 4>}, {pipeline_mode = #tpu.pipeline_mode<synchronous>, transform_indices = @transform_2, window_bounds = array<i64: 8, 1>}, {transform_indices = @transform_3, window_bounds = array<i64: 2, 8, 256>}]} {
    %c0 = arith.constant 0 : index
    %c0_0 = arith.constant 0 : index
    %0 = vector.load %arg3[%c0, %c0_0] : memref<8x4xf32, #tpu.memory_space<vmem>>, vector<8x4xf32>
    %c0_1 = arith.constant 0 : index
    %c0_2 = arith.constant 0 : index
    %1 = vector.load %arg4[%c0_1, %c0_2] : memref<8x1xf32, #tpu.memory_space<vmem>>, vector<8x1xf32>
    %c0_i32 = arith.constant 0 : i32
    %c2_i32 = arith.constant 2 : i32
    %2 = arith.addi %c0_i32, %c2_i32 : i32
    %c1_i32 = arith.constant 1 : i32
    scf.for %arg6 = %c0_i32 to %2 step %c1_i32  : i32 {
      %3 = vector.extract_strided_slice %0 {offsets = [0, 0], sizes = [8, 1], strides = [1, 1]} : vector<8x4xf32> to vector<8x1xf32>
      %4 = arith.index_cast %arg6 : i32 to index
      %c0_4 = arith.constant 0 : index
      %c0_5 = arith.constant 0 : index
      %5 = vector.load %arg2[%4, %c0_4, %c0_5] : memref<2x4x256xf32, #tpu.memory_space<vmem>>, vector<1x1x256xf32>
      %6 = vector.shape_cast %5 : vector<1x1x256xf32> to vector<1x256xf32>
      %7 = vector.broadcast %3 : vector<8x1xf32> to vector<8x256xf32>
      %8 = vector.broadcast %6 : vector<1x256xf32> to vector<8x256xf32>
      %9 = arith.mulf %7, %8 : vector<8x256xf32>
      %10 = vector.extract_strided_slice %0 {offsets = [0, 1], sizes = [8, 1], strides = [1, 1]} : vector<8x4xf32> to vector<8x1xf32>
      %11 = arith.index_cast %arg6 : i32 to index
      %c1 = arith.constant 1 : index
      %c0_6 = arith.constant 0 : index
      %12 = vector.load %arg2[%11, %c1, %c0_6] : memref<2x4x256xf32, #tpu.memory_space<vmem>>, vector<1x1x256xf32>
      %13 = vector.shape_cast %12 : vector<1x1x256xf32> to vector<1x256xf32>
      %14 = vector.broadcast %10 : vector<8x1xf32> to vector<8x256xf32>
      %15 = vector.broadcast %13 : vector<1x256xf32> to vector<8x256xf32>
      %16 = arith.mulf %14, %15 : vector<8x256xf32>
      %17 = arith.addf %9, %16 : vector<8x256xf32>
      %18 = vector.extract_strided_slice %0 {offsets = [0, 2], sizes = [8, 1], strides = [1, 1]} : vector<8x4xf32> to vector<8x1xf32>
      %19 = arith.index_cast %arg6 : i32 to index
      %c2 = arith.constant 2 : index
      %c0_7 = arith.constant 0 : index
      %20 = vector.load %arg2[%19, %c2, %c0_7] : memref<2x4x256xf32, #tpu.memory_space<vmem>>, vector<1x1x256xf32>
      %21 = vector.shape_cast %20 : vector<1x1x256xf32> to vector<1x256xf32>
      %22 = vector.broadcast %18 : vector<8x1xf32> to vector<8x256xf32>
      %23 = vector.broadcast %21 : vector<1x256xf32> to vector<8x256xf32>
      %24 = arith.mulf %22, %23 : vector<8x256xf32>
      %25 = arith.addf %17, %24 : vector<8x256xf32>
      %26 = vector.extract_strided_slice %0 {offsets = [0, 3], sizes = [8, 1], strides = [1, 1]} : vector<8x4xf32> to vector<8x1xf32>
      %27 = arith.index_cast %arg6 : i32 to index
      %c3 = arith.constant 3 : index
      %c0_8 = arith.constant 0 : index
      %28 = vector.load %arg2[%27, %c3, %c0_8] : memref<2x4x256xf32, #tpu.memory_space<vmem>>, vector<1x1x256xf32>
      %29 = vector.shape_cast %28 : vector<1x1x256xf32> to vector<1x256xf32>
      %30 = vector.broadcast %26 : vector<8x1xf32> to vector<8x256xf32>
      %31 = vector.broadcast %29 : vector<1x256xf32> to vector<8x256xf32>
      %32 = arith.mulf %30, %31 : vector<8x256xf32>
      %33 = arith.addf %25, %32 : vector<8x256xf32>
      %34 = vector.broadcast %1 : vector<8x1xf32> to vector<8x256xf32>
      %35 = arith.addf %33, %34 : vector<8x256xf32>
      %36 = arith.index_cast %arg6 : i32 to index
      %c0_9 = arith.constant 0 : index
      %c0_10 = arith.constant 0 : index
      %37 = vector.load %arg5[%36, %c0_9, %c0_10] : memref<2x8x256xf32, #tpu.memory_space<vmem>>, vector<1x8x256xf32>
      %38 = vector.shape_cast %37 : vector<1x8x256xf32> to vector<8x256xf32>
      %39 = vector.shape_cast %35 : vector<8x256xf32> to vector<1x8x256xf32>
      tpu.vector_store %arg5[%36, %c0_9, %c0_10], %39 {strides = array<i32>} : memref<2x8x256xf32, #tpu.memory_space<vmem>>, vector<1x8x256xf32>,
    }
    %c2_i32_3 = arith.constant 2 : i32
    return
  }
  func.func @transform_0(%arg0: i32, %arg1: i32) -> (i32, i32, i32) {
    %c0_i32 = arith.constant 0 : i32
    %c0_i32_0 = arith.constant 0 : i32
    return %arg0, %c0_i32, %arg1 : i32, i32, i32
  }
  func.func @transform_1(%arg0: i32, %arg1: i32) -> (i32, i32) {
    %c0_i32 = arith.constant 0 : i32
    %c0_i32_0 = arith.constant 0 : i32
    %c0_i32_1 = arith.constant 0 : i32
    return %c0_i32, %c0_i32_0 : i32, i32
  }
  func.func @transform_2(%arg0: i32, %arg1: i32) -> (i32, i32) {
    %c0_i32 = arith.constant 0 : i32
    %c0_i32_0 = arith.constant 0 : i32
    %c0_i32_1 = arith.constant 0 : i32
    return %c0_i32, %c0_i32_0 : i32, i32
  }
  func.func @transform_3(%arg0: i32, %arg1: i32) -> (i32, i32, i32) {
    %c0_i32 = arith.constant 0 : i32
    %c0_i32_0 = arith.constant 0 : i32
    return %arg0, %c0_i32, %arg1 : i32, i32, i32
  }
}

</mosaic_0001>

<llo_original>
// kernel: tpu_custom_call.1
$region0: #{tpu_custom_call.1}
  #allocation0 [shape = 'u32[]', space=smem, size = 0x4, offset = 0x4, fixed_abs, tag = 'smem constant byte address 0x4 - core index']
  #allocation1 [shape = 'u32[72,128]{1,0:T(1,128)}', space=vmem, size = 0x9000, scoped, tag = 'internal scratch']
  %s0 = inlined_call_operand.vmem [shape: f32[2,4,256], index: 0, kind: input, shape index: {}]
  %s1 = inlined_call_operand.vmem [shape: f32[8,4], index: 1, kind: input, shape index: {}]
  %s2 = inlined_call_operand.vmem [shape: f32[8,1], index: 2, kind: input, shape index: {}]
  %s3 = inlined_call_operand.hbm [shape: f32[2,8,256], index: 3, kind: output, shape index: {}]
  %s4 = sld [smem:[#allocation0]]
  $region29: #{tpu_custom_call.1} parent=0
    _
  %s6 = ssub.s32 1, %s4
  %s7 = scalar_select 0, %s6, %s4
  $region1: #{tpu_custom_call.1} parent=0
    #allocation2 [shape = 'u8[16384]{0}', space=vmem, size = 0x4000, scoped, tag = 'output window, operand 0, single buffered']
    #allocation3 [shape = 's32[1]{0}', space=sflag, size = 0x4, scoped, tag = 'scoped memory for tpu_custom_call.1']
    %8 = vsyncpa [#allocation3], 0
    // Predicated region
    $region2: #{tpu_custom_call.1} parent=1 // pred_check
      _
    $region3: #{tpu_custom_call.1} parent=1 // pred_check_branch
      %10 = sbr.rel (0) target = $region5
    $region4: #{tpu_custom_call.1} parent=1 // pred_region
      _
    $region5: #{tpu_custom_call.1} parent=1 // pred_fallthru
      _
    // Predicated region
    $region6: #{tpu_custom_call.1} parent=1 // pred_check
      _
    $region7: #{tpu_custom_call.1} parent=1 // pred_check_branch
      %12 = sbr.rel (0) target = $region9
    $region8: #{tpu_custom_call.1} parent=1 // pred_region
      _
    $region9: #{tpu_custom_call.1} parent=1 // pred_fallthru
      _
    // Predicated region
    $region10: #{tpu_custom_call.1} parent=1 // pred_check
      _
    $region11: #{tpu_custom_call.1} parent=1 // pred_check_branch
      %14 = sbr.rel (0) target = $region13
    $region12: #{tpu_custom_call.1} parent=1 // pred_region
      _
    $region13: #{tpu_custom_call.1} parent=1 // pred_fallthru
      _
    %v15 = vld [vmem:[%s1] sm:$0xff]
    %v16 = vld [vmem:[%s2] sm:$0xff]
    loop: start=0, step=1, limit=2
    $region14: #{tpu_custom_call.1} parent=1 // loop_pre_header
      _
    $region15: #{tpu_custom_call.1} parent=1 // loop_header
      %s18 = sphi 0, %s22
      %p19 = scmp.ge.s32.totalorder %s18, 2
    $region16: #{tpu_custom_call.1} parent=1 // loop_header_branch
      %21 = sbr.rel (%p19) target = $region20
    $region17: #{tpu_custom_call.1} parent=1 // loop_body
      %s23 = smul.u32 %s18, 2
      %s24 = smul.addr %s23, 4
      %s25 = scalar_lea.vmem %s0, %s24
      %v26 = vld [vmem:[%s25] ss:$4 sm:$0x3]
      %28 = vset.pattern.permute.xlu0 0
      %29 = vperm.xlu0 %28, %v15
      %v30 = vpop.permute.xlu0 %29
      %v33 = vperm.slane %v26, 0
      %v34 = vperm.slane %v26, 1
      %v37 = vmul.f32 %v30, %v33
      %v38 = vmul.f32 %v30, %v34
      %s39 = scalar_lea.vmem %s25, 1
      %v40 = vld [vmem:[%s39] ss:$4 sm:$0x3]
      %41 = vset.pattern.permute.xlu0 1
      %42 = vperm.xlu0 %41, %v15
      %v43 = vpop.permute.xlu0 %42
      %v46 = vperm.slane %v40, 0
      %v47 = vperm.slane %v40, 1
      %v50 = vmul.f32 %v43, %v46
      %v51 = vmul.f32 %v43, %v47
      %v52 = vadd.f32 %v37, %v50
      %v53 = vadd.f32 %v38, %v51
      %s54 = scalar_lea.vmem %s25, 2
      %v55 = vld [vmem:[%s54] ss:$4 sm:$0x3]
      %56 = vset.pattern.permute.xlu0 2
      %57 = vperm.xlu0 %56, %v15
      %v58 = vpop.permute.xlu0 %57
      %v61 = vperm.slane %v55, 0
      %v62 = vperm.slane %v55, 1
      %v65 = vmul.f32 %v58, %v61
      %v66 = vmul.f32 %v58, %v62
      %v67 = vadd.f32 %v52, %v65
      %v68 = vadd.f32 %v53, %v66
      %s69 = scalar_lea.vmem %s25, 3
      %v70 = vld [vmem:[%s69] ss:$4 sm:$0x3]
      %71 = vset.pattern.permute.xlu0 3
      %72 = vperm.xlu0 %71, %v15
      %v73 = vpop.permute.xlu0 %72
      %v76 = vperm.slane %v70, 0
      %v77 = vperm.slane %v70, 1
      %v80 = vmul.f32 %v73, %v76
      %v81 = vmul.f32 %v73, %v77
      %v82 = vadd.f32 %v67, %v80
      %v83 = vadd.f32 %v68, %v81
      %85 = vset.pattern.permute.xlu0 0
      %86 = vperm.xlu0 %85, %v16
      %v87 = vpop.permute.xlu0 %86
      %v89 = vadd.f32 %v82, %v87
      %v90 = vadd.f32 %v83, %v87
      %s91 = smul.addr %s23, 8
      %s92 = scalar_lea.vmem [#allocation2], %s91
      %93 = vst [vmem:[%s92] sm:$0xff] %v89
      %94 = vst [vmem:[%s92 + $0x8] sm:$0xff] %v90
    $region18: #{tpu_custom_call.1} parent=1 // loop_footer
      %s22 = sadd.s32 1, %s18
    $region19: #{tpu_custom_call.1} parent=1 // loop_footer_branch
      %17 = sbr.rel target = $region15
    $region20: #{tpu_custom_call.1} parent=1 // loop_exit
      _
    // Predicated region
    $region21: #{tpu_custom_call.1} parent=1 // pred_check
      _
    $region22: #{tpu_custom_call.1} parent=1 // pred_check_branch
      %96 = sbr.rel (0) target = $region24
    $region23: #{tpu_custom_call.1} parent=1 // pred_region
      %98 = vsyncadd [#allocation3], 0
      %s99 = sshll.u32 [#allocation2], 4
      %s100 = int_to_ptr.vmem [resolvable:$true] %s99
      %s101 = sshll.u32 %s3, 4
      %s102 = int_to_ptr.hbm [resolvable:$true] %s101
      %107 = dma.vmem_to_hbm [thread:$0]  %s100, 512, %s102, [#allocation3], 256, 256, 16
    $region24: #{tpu_custom_call.1} parent=1 // pred_fallthru
      _
    // Predicated region
    $region25: #{tpu_custom_call.1} parent=1 // pred_check
      _
    $region26: #{tpu_custom_call.1} parent=1 // pred_check_branch
      %109 = sbr.rel (0) target = $region28
    $region27: #{tpu_custom_call.1} parent=1 // pred_region
      %111 = dma.done [#allocation3], 512
    $region28: #{tpu_custom_call.1} parent=1 // pred_fallthru
      _
    %112 = vsyncpa [#allocation3], 1

</llo_original>
